<compile_context>
chip_gen: v6e
topology: v6e:2x2x1
jax: 0.10.0
libtpu: 0.0.40
codegen_flags: <defaults>
</compile_context>

<pallas_src>
import jax
import jax.numpy as jnp
import numpy as np
from jax.experimental import pallas as pl
from jax.experimental.pallas import tpu as pltpu


def _round_up(n, m):
    return ((n + m - 1) // m) * m


# ----------------------------------------------------------------------------
# Deterministic parameter init mimicking stable-baselines3 layer_init:
# orthogonal weights with gain `std`, zero bias.  PyTorch weight shapes kept.
# ----------------------------------------------------------------------------
def orthogonal_init(key, shape, gain):
    """Orthogonal init matching torch.nn.init.orthogonal_ semantics.

    `shape` is the PyTorch weight shape (out_features, in_features).
    """
    rows, cols = shape
    a = jax.random.normal(key, (rows, cols), dtype=jnp.float32)
    if rows < cols:
        a = a.T
    q, r = jnp.linalg.qr(a)
    d = jnp.sign(jnp.diagonal(r))
    q = q * d[None, :]
    if rows < cols:
        q = q.T
    return gain * q[:rows, :cols]


def make_params(key, n_observations, num_cells):
    k1, k2, k3 = jax.random.split(key, 3)
    std = float(np.sqrt(2.0))
    # PyTorch shapes: W (out, in), biases stored as (out, 1) columns so they
    # broadcast along the lane (batch) axis inside the kernel.
    w1 = orthogonal_init(k1, (num_cells, n_observations), std)   # (num_cells, n_obs)
    b1 = jnp.zeros((num_cells, 1), jnp.float32)
    w2 = orthogonal_init(k2, (num_cells, num_cells), std)        # (num_cells, num_cells)
    b2 = jnp.zeros((num_cells, 1), jnp.float32)
    w3 = orthogonal_init(k3, (1, num_cells), 1.0)                 # (1, num_cells)
    b3 = jnp.zeros((1, 1), jnp.float32)
    return w1, b1, w2, b2, w3, b3


# ----------------------------------------------------------------------------
# Pallas kernel: full 3-layer MLP forward for one batch tile, transposed form.
#   xT tile : (n_obs,     TB)   streamed / double-buffered
#   h1, h2  : (num_cells, TB)   f32, batch on the lane axis
#   out     : (1,         TB)   lane-dense output block
# ----------------------------------------------------------------------------
def critic_kernel(x_ref, w1_ref, b1_ref, w2_ref, b2_ref, w3_ref, b3_ref, out_ref):
    xt = x_ref[...]                                              # (n_obs, TB)
    # Layer 1: (num_cells, n_obs) @ (n_obs, TB) -> (num_cells, TB), f32 acc.
    h1 = jnp.tanh(
        jnp.dot(w1_ref[...], xt, preferred_element_type=jnp.float32)
        + b1_ref[...])
    # Layer 2: (num_cells, num_cells) @ (num_cells, TB).  Cast the activation
    # to the weight dtype so the bf16 path keeps bf16 MXU operands while the
    # accumulation / bias / tanh stay f32 (v5e-safe).  No-op cast in f32 mode.
    h2 = jnp.tanh(
        jnp.dot(w2_ref[...], h1.astype(w2_ref.dtype),
                preferred_element_type=jnp.float32)
        + b2_ref[...])
    # Value head: (1, num_cells) @ (num_cells, TB) -> lane-dense (1, TB).
    out_ref[...] = (
        jnp.dot(w3_ref[...], h2.astype(w3_ref.dtype),
                preferred_element_type=jnp.float32)
        + b3_ref[0, 0])


def critic_forward_ref(x, params):
    """Pure-JAX reference (also the small-batch fast path)."""
    w1, b1, w2, b2, w3, b3 = params
    h1 = jnp.tanh(x @ w1.T + b1[:, 0])
    h2 = jnp.tanh(h1 @ w2.T + b2[:, 0])
    return h2 @ w3.T + b3[:, 0]


def critic_forward(x, params, *, block_batch=2048, use_bf16=False,
                   small_batch_threshold=256):
    w1, b1, w2, b2, w3, b3 = params
    batch, n_obs = x.shape

    # Small-batch bypass: one grid step of fixed pallas_call/DMA overhead loses
    # to a fused XLA dot chain, and avoids padding a handful of rows to 256.
    if batch < small_batch_threshold:
        return critic_forward_ref(x, params)

    # --- batch tiling -------------------------------------------------------
    # TB is a multiple of 256 (MXU output width on v6e/v7x, also 2x the 128
    # lane width), large enough to amortize the ~0.35us per-grid-step overhead,
    # and capped so the grid has >=2 steps when possible (v7x megacore).
    MIN_TILE = 256
    padded_min = _round_up(batch, MIN_TILE)
    tb = min(block_batch, padded_min)
    if padded_min >= 2 * MIN_TILE:
        tb = min(tb, _round_up(pl.cdiv(padded_min, 2), MIN_TILE))
    padded = _round_up(batch, tb)
    grid = (padded // tb,)

    # --- operand staging ----------------------------------------------------
    dot_dtype = jnp.bfloat16 if use_bf16 else jnp.float32
    # Transpose x so the batch rides the lane axis; pad batch (columns) only.
    xt = x.T.astype(dot_dtype)                                   # (n_obs, batch)
    if padded != batch:
        xt = jnp.pad(xt, ((0, 0), (0, padded - batch)))
    w1c = w1.astype(dot_dtype)
    w2c = w2.astype(dot_dtype)
    w3c = w3.astype(dot_dtype)
    # Biases stay f32 (added post-accumulation).

    def resident(a):  # constant block index -> stays in VMEM across the grid
        return pl.BlockSpec(a.shape, lambda i: (0, 0))

    out = pl.pallas_call(
        critic_kernel,
        out_shape=jax.ShapeDtypeStruct((1, padded), jnp.float32),
        grid=grid,
        in_specs=[
            pl.BlockSpec((n_obs, tb), lambda i: (0, i)),   # streamed xT tile
            resident(w1c), resident(b1),
            resident(w2c), resident(b2),
            resident(w3c),
            # b3 is a true scalar: keep it in SMEM (no padded VMEM tile / DMA).
            pl.BlockSpec(memory_space=pltpu.MemorySpace.SMEM),
        ],
        out_specs=pl.BlockSpec((1, tb), lambda i: (0, i)),
        # Batch axis is embarrassingly parallel: sharded across v7x's two
        # TensorCores (>=2 grid steps guaranteed above); harmless on v5e/v6e.
        # VMEM footprint (double-buffered (n_obs, TB) tile + tiny resident
        # weights + (1, TB) out tile) is far below default scoped limits.
        compiler_params=pltpu.CompilerParams(dimension_semantics=("parallel",)),
    )(xt, w1c, b1, w2c, b2, w3c, b3)

    # Kernel writes a lane-dense (1, padded) slab; restore (batch, 1) parity.
    return out[0, :batch].reshape(batch, 1)


if __name__ == "__main__":
    # Shapes consistent with the module: n_observations=16, num_cells=32.
    n_observations = 16
    num_cells = 32

    key = jax.random.PRNGKey(0)
    k_params, k_x1, k_x2, k_x3 = jax.random.split(key, 4)
    params = make_params(k_params, n_observations, num_cells)

    # 1) Small batch (8): exercises the small-batch bypass path.
    x_small = jax.random.normal(k_x1, (8, n_observations), dtype=jnp.float32)
    out_small = jax.block_until_ready(critic_forward(x_small, params))
    assert out_small.shape == (8, 1)
    np.testing.assert_allclose(
        np.asarray(out_small),
        np.asarray(critic_forward_ref(x_small, params)), rtol=1e-5, atol=1e-5)

    # 2) batch=512: Pallas path, tb=256 -> 2 grid steps (both v7x cores busy).
    x_big = jax.random.normal(k_x2, (512, n_observations), dtype=jnp.float32)
    out_big = jax.block_until_ready(critic_forward(x_big, params))
    assert out_big.shape == (512, 1)
    np.testing.assert_allclose(
        np.asarray(out_big),
        np.asarray(critic_forward_ref(x_big, params)), rtol=1e-5, atol=1e-5)

    # 3) batch=300: Pallas path with batch padding (300 -> 512, sliced back).
    x_pad = jax.random.normal(k_x3, (300, n_observations), dtype=jnp.float32)
    out_pad = jax.block_until_ready(critic_forward(x_pad, params))
    assert out_pad.shape == (300, 1)
    np.testing.assert_allclose(
        np.asarray(out_pad),
        np.asarray(critic_forward_ref(x_pad, params)), rtol=1e-5, atol=1e-5)

    # 4) bf16 MXU-operand path (f32 accumulation / bias / tanh), loose tol.
    out_bf16 = jax.block_until_ready(critic_forward(x_big, params, use_bf16=True))
    np.testing.assert_allclose(
        np.asarray(out_bf16),
        np.asarray(critic_forward_ref(x_big, params)), rtol=1e-1, atol=1e-1)

    print("KERNEL_OK")
</pallas_src>

<mosaic_0001>
module attributes {stable_mosaic.version = 11 : i64} {
  func.func @critic_kernel(%arg0: i32, %arg1: memref<16x256xf32, #tpu.memory_space<vmem>>, %arg2: memref<32x16xf32, #tpu.memory_space<vmem>>, %arg3: memref<32x1xf32, #tpu.memory_space<vmem>>, %arg4: memref<32x32xf32, #tpu.memory_space<vmem>>, %arg5: memref<32x1xf32, #tpu.memory_space<vmem>>, %arg6: memref<1x32xf32, #tpu.memory_space<vmem>>, %arg7: memref<1x1xf32, #tpu.memory_space<smem>>, %arg8: memref<1x256xf32, #tpu.memory_space<vmem>>) attributes {dimension_semantics = [#tpu.dimension_semantics<parallel>], iteration_bounds = array<i64: 2>, scalar_prefetch = 0 : i64, scratch_operands = 0 : i64, tpu.core_type = #tpu.core_type<tc>, window_params = [{transform_indices = @transform_0, window_bounds = array<i64: 16, 256>}, {pipeline_mode = #tpu.pipeline_mode<synchronous>, transform_indices = @transform_1, window_bounds = array<i64: 32, 16>}, {pipeline_mode = #tpu.pipeline_mode<synchronous>, transform_indices = @transform_2, window_bounds = array<i64: 32, 1>}, {pipeline_mode = #tpu.pipeline_mode<synchronous>, transform_indices = @transform_3, window_bounds = array<i64: 32, 32>}, {pipeline_mode = #tpu.pipeline_mode<synchronous>, transform_indices = @transform_4, window_bounds = array<i64: 32, 1>}, {pipeline_mode = #tpu.pipeline_mode<synchronous>, transform_indices = @transform_5, window_bounds = array<i64: 1, 32>}, {transform_indices = @transform_6, window_bounds = array<i64: 1, 1>}, {transform_indices = @transform_7, window_bounds = array<i64: 1, 256>}]} {
    %c0 = arith.constant 0 : index
    %c0_0 = arith.constant 0 : index
    %0 = vector.load %arg1[%c0, %c0_0] : memref<16x256xf32, #tpu.memory_space<vmem>>, vector<16x256xf32>
    %c0_1 = arith.constant 0 : index
    %c0_2 = arith.constant 0 : index
    %1 = vector.load %arg2[%c0_1, %c0_2] : memref<32x16xf32, #tpu.memory_space<vmem>>, vector<32x16xf32>
    %cst = arith.constant dense<0.000000e+00> : vector<32x256xf32>
    %2 = tpu.matmul %1, %0, %cst {dimension_numbers = #tpu.dot_dimension_numbers<[1], [0], [0], [1], [0, 0, 1, 1], [], []>} : vector<32x16xf32>, vector<16x256xf32>, vector<32x256xf32> -> vector<32x256xf32>
    %c0_3 = arith.constant 0 : index
    %c0_4 = arith.constant 0 : index
    %3 = vector.load %arg3[%c0_3, %c0_4] : memref<32x1xf32, #tpu.memory_space<vmem>>, vector<32x1xf32>
    %4 = vector.broadcast %3 : vector<32x1xf32> to vector<32x256xf32>
    %5 = arith.addf %2, %4 : vector<32x256xf32>
    %6 = math.tanh %5 : vector<32x256xf32>
    %c0_5 = arith.constant 0 : index
    %c0_6 = arith.constant 0 : index
    %7 = vector.load %arg4[%c0_5, %c0_6] : memref<32x32xf32, #tpu.memory_space<vmem>>, vector<32x32xf32>
    %cst_7 = arith.constant dense<0.000000e+00> : vector<32x256xf32>
    %8 = tpu.matmul %7, %6, %cst_7 {dimension_numbers = #tpu.dot_dimension_numbers<[1], [0], [0], [1], [0, 0, 1, 1], [], []>} : vector<32x32xf32>, vector<32x256xf32>, vector<32x256xf32> -> vector<32x256xf32>
    %c0_8 = arith.constant 0 : index
    %c0_9 = arith.constant 0 : index
    %9 = vector.load %arg5[%c0_8, %c0_9] : memref<32x1xf32, #tpu.memory_space<vmem>>, vector<32x1xf32>
    %10 = vector.broadcast %9 : vector<32x1xf32> to vector<32x256xf32>
    %11 = arith.addf %8, %10 : vector<32x256xf32>
    %12 = math.tanh %11 : vector<32x256xf32>
    %c0_10 = arith.constant 0 : index
    %c0_11 = arith.constant 0 : index
    %13 = vector.load %arg6[%c0_10, %c0_11] : memref<1x32xf32, #tpu.memory_space<vmem>>, vector<1x32xf32>
    %cst_12 = arith.constant dense<0.000000e+00> : vector<1x256xf32>
    %14 = tpu.matmul %13, %12, %cst_12 {dimension_numbers = #tpu.dot_dimension_numbers<[1], [0], [0], [1], [0, 0, 1, 1], [], []>} : vector<1x32xf32>, vector<32x256xf32>, vector<1x256xf32> -> vector<1x256xf32>
    %c0_13 = arith.constant 0 : index
    %c0_14 = arith.constant 0 : index
    %15 = memref.load %arg7[%c0_13, %c0_14] : memref<1x1xf32, #tpu.memory_space<smem>>
    %16 = vector.broadcast %15 : f32 to vector<1x256xf32>
    %17 = arith.addf %14, %16 : vector<1x256xf32>
    %c0_15 = arith.constant 0 : index
    %c0_16 = arith.constant 0 : index
    %18 = vector.load %arg8[%c0_15, %c0_16] : memref<1x256xf32, #tpu.memory_space<vmem>>, vector<1x256xf32>
    tpu.vector_store %arg8[%c0_15, %c0_16], %17 {strides = array<i32>} : memref<1x256xf32, #tpu.memory_space<vmem>>, vector<1x256xf32>,
    return
  }
  func.func @transform_0(%arg0: i32) -> (i32, i32) {
    %c0_i32 = arith.constant 0 : i32
    %c0_i32_0 = arith.constant 0 : i32
    return %c0_i32, %arg0 : i32, i32
  }
  func.func @transform_1(%arg0: i32) -> (i32, i32) {
    %c0_i32 = arith.constant 0 : i32
    %c0_i32_0 = arith.constant 0 : i32
    %c0_i32_1 = arith.constant 0 : i32
    return %c0_i32, %c0_i32_0 : i32, i32
  }
  func.func @transform_2(%arg0: i32) -> (i32, i32) {
    %c0_i32 = arith.constant 0 : i32
    %c0_i32_0 = arith.constant 0 : i32
    %c0_i32_1 = arith.constant 0 : i32
    return %c0_i32, %c0_i32_0 : i32, i32
  }
  func.func @transform_3(%arg0: i32) -> (i32, i32) {
    %c0_i32 = arith.constant 0 : i32
    %c0_i32_0 = arith.constant 0 : i32
    %c0_i32_1 = arith.constant 0 : i32
    return %c0_i32, %c0_i32_0 : i32, i32
  }
  func.func @transform_4(%arg0: i32) -> (i32, i32) {
    %c0_i32 = arith.constant 0 : i32
    %c0_i32_0 = arith.constant 0 : i32
    %c0_i32_1 = arith.constant 0 : i32
    return %c0_i32, %c0_i32_0 : i32, i32
  }
  func.func @transform_5(%arg0: i32) -> (i32, i32) {
    %c0_i32 = arith.constant 0 : i32
    %c0_i32_0 = arith.constant 0 : i32
    %c0_i32_1 = arith.constant 0 : i32
    return %c0_i32, %c0_i32_0 : i32, i32
  }
  func.func @transform_6(%arg0: i32) -> (i32, i32) {
    %c0_i32 = arith.constant 0 : i32
    %c0_i32_0 = arith.constant 0 : i32
    %c0_i32_1 = arith.constant 0 : i32
    return %c0_i32, %c0_i32_0 : i32, i32
  }
  func.func @transform_7(%arg0: i32) -> (i32, i32) {
    %c0_i32 = arith.constant 0 : i32
    %c0_i32_0 = arith.constant 0 : i32
    return %c0_i32, %arg0 : i32, i32
  }
}

</mosaic_0001>

<llo_original>
// kernel: tpu_custom_call.1
$region0: #{tpu_custom_call.1}
  #allocation0 [shape = 'u32[]', space=smem, size = 0x4, offset = 0x4, fixed_abs, tag = 'smem constant byte address 0x4 - core index']
  #allocation1 [shape = 'u32[144,128]{1,0:T(1,128)}', space=vmem, size = 0x12000, scoped, tag = 'internal scratch']
  #allocation2 [shape = 'f32[1,1]{1,0:T(1,128)S(6)}', space=smem, size = 0x200, scoped, tag = 'scoped memory for tpu_custom_call.1']
  %s0 = inlined_call_operand.vmem [shape: f32[16,512], index: 0, kind: input, shape index: {}]
  %s1 = inlined_call_operand.vmem [shape: f32[32,16], index: 1, kind: input, shape index: {}]
  %s2 = inlined_call_operand.vmem [shape: f32[32,1], index: 2, kind: input, shape index: {}]
  %s3 = inlined_call_operand.vmem [shape: f32[32,32], index: 3, kind: input, shape index: {}]
  %s4 = inlined_call_operand.vmem [shape: f32[32,1], index: 4, kind: input, shape index: {}]
  %s5 = inlined_call_operand.vmem [shape: f32[1,32], index: 5, kind: input, shape index: {}]
  %s6 = inlined_call_operand.<no memory space> [shape: f32[1,1], index: 6, kind: input, shape index: {}]
  %s7 = inlined_call_operand.hbm [shape: f32[1,512], index: 7, kind: output, shape index: {}]
  %s8 = sld [smem:[#allocation0]]
  $region84: #{tpu_custom_call.1} parent=0
    _
  %s10 = ssub.s32 1, %s8
  %s11 = scalar_select 0, %s10, %s8
  %12 = sst [smem:[#allocation2]] %s6
  $region1: #{tpu_custom_call.1} parent=0
    #allocation3 [shape = 'u8[32768]{0}', space=vmem, size = 0x8000, scoped, tag = 'input window, operand 0']
    #allocation4 [shape = 'u8[2048]{0}', space=vmem, size = 0x800, scoped, tag = 'output window, operand 0']
    #allocation5 [shape = 's32[2]{0}', space=sflag, size = 0x8, scoped, tag = 'scoped memory for tpu_custom_call.1']
    %13 = vsyncpa [#allocation5], 0
    %s14 = scalar_lea.sflag [#allocation5], 1
    %15 = vsyncpa %s14, 0
    loop: start=0, step=1, limit=4
    $region2: #{tpu_custom_call.1} parent=1 // loop_pre_header
      _
    $region3: #{tpu_custom_call.1} parent=1 // loop_header
      %s17 = sphi 0, %s21
      %p18 = scmp.ge.s32.totalorder %s17, 4
      %s27 = sphi 0, %s29
      %s30 = sphi 0, %s27
      %s31 = sphi 0, %s30
      %s47 = sphi 0, %s31
      %s51 = sphi 0, %s51
      %s53 = sphi 0, %s51
      %s54 = sphi 0, %s53
      %s68 = sphi 0, %s54
      %s72 = sphi 0, %s72
      %s74 = sphi 0, %s72
      %s75 = sphi 0, %s74
      %s89 = sphi 0, %s75
      %s93 = sphi 0, %s93
      %s95 = sphi 0, %s93
      %s96 = sphi 0, %s95
      %s110 = sphi 0, %s96
      %s114 = sphi 0, %s114
      %s116 = sphi 0, %s114
      %s117 = sphi 0, %s116
      %s131 = sphi 0, %s117
      %s135 = sphi 0, %s135
      %s137 = sphi 0, %s135
      %s138 = sphi 0, %s137
      %s152 = sphi 0, %s138
      %s156 = sphi 0, %s156
      %s158 = sphi 0, %s156
      %s159 = sphi 0, %s158
      %s173 = sphi 0, %s159
      %s179 = sphi 0, %s181
      %s182 = sphi 0, %s179
      %s183 = sphi 0, %s182
      %s199 = sphi 0, %s183
    $region4: #{tpu_custom_call.1} parent=1 // loop_header_branch
      %20 = sbr.rel (%p18) target = $region8
    $region5: #{tpu_custom_call.1} parent=1 // loop_body
      %s22 = ssub.s32 %s17, 1
      %s23 = ssub.s32 %s17, 2
      %s24 = sadd.s32 %s17, 1
      %s25 = ssub.s32 %s17, %s24
      %p26 = scmp.eq.s32.totalorder %s25, 0
      %s28 = sadd.s32 %s27, 1
      %s29 = scalar_select %p26, %s27, %s28
      %p32 = pneg %p26
      %p33 = scmp.eq.s32.totalorder %s17, 1
      %p34 = por %p32, %p33
      %p35 = scmp.ne.s32.totalorder %s27, %s30
      %p36 = scmp.eq.s32.totalorder %s17, 0
      %p37 = por %p35, %p36
      %p38 = scmp.ne.s32.totalorder %s27, %s30
      %p39 = scmp.eq.s32.totalorder %s22, 1
      %p40 = por %p38, %p39
      %p41 = scmp.ne.s32.totalorder %s30, %s31
      %p42 = scmp.eq.s32.totalorder %s22, 0
      %p43 = por %p41, %p42
      %p44 = scmp.ne.s32.totalorder %s30, %s31
      %p45 = scmp.eq.s32.totalorder %s23, 1
      %p46 = por %p44, %p45
      %p48 = scmp.ne.s32.totalorder %s31, %s47
      %p49 = scmp.eq.s32.totalorder %s23, 0
      %p50 = por %p48, %p49
      %s52 = sadd.s32 %s51, 1
      %p55 = scmp.eq.s32.totalorder %s17, 1
      %p56 = scmp.ne.s32.totalorder %s51, %s53
      %p57 = scmp.eq.s32.totalorder %s17, 0
      %p58 = por %p56, %p57
      %p59 = scmp.ne.s32.totalorder %s51, %s53
      %p60 = scmp.eq.s32.totalorder %s22, 1
      %p61 = por %p59, %p60
      %p62 = scmp.ne.s32.totalorder %s53, %s54
      %p63 = scmp.eq.s32.totalorder %s22, 0
      %p64 = por %p62, %p63
      %p65 = scmp.ne.s32.totalorder %s53, %s54
      %p66 = scmp.eq.s32.totalorder %s23, 1
      %p67 = por %p65, %p66
      %p69 = scmp.ne.s32.totalorder %s54, %s68
      %p70 = scmp.eq.s32.totalorder %s23, 0
      %p71 = por %p69, %p70
      %s73 = sadd.s32 %s72, 1
      %p76 = scmp.eq.s32.totalorder %s17, 1
      %p77 = scmp.ne.s32.totalorder %s72, %s74
      %p78 = scmp.eq.s32.totalorder %s17, 0
      %p79 = por %p77, %p78
      %p80 = scmp.ne.s32.totalorder %s72, %s74
      %p81 = scmp.eq.s32.totalorder %s22, 1
      %p82 = por %p80, %p81
      %p83 = scmp.ne.s32.totalorder %s74, %s75
      %p84 = scmp.eq.s32.totalorder %s22, 0
      %p85 = por %p83, %p84
      %p86 = scmp.ne.s32.totalorder %s74, %s75
      %p87 = scmp.eq.s32.totalorder %s23, 1
      %p88 = por %p86, %p87
      %p90 = scmp.ne.s32.totalorder %s75, %s89
      %p91 = scmp.eq.s32.totalorder %s23, 0
      %p92 = por %p90, %p91
      %s94 = sadd.s32 %s93, 1
      %p97 = scmp.eq.s32.totalorder %s17, 1
      %p98 = scmp.ne.s32.totalorder %s93, %s95
      %p99 = scmp.eq.s32.totalorder %s17, 0
      %p100 = por %p98, %p99
      %p101 = scmp.ne.s32.totalorder %s93, %s95
      %p102 = scmp.eq.s32.totalorder %s22, 1
      %p103 = por %p101, %p102
      %p104 = scmp.ne.s32.totalorder %s95, %s96
      %p105 = scmp.eq.s32.totalorder %s22, 0
      %p106 = por %p104, %p105
      %p107 = scmp.ne.s32.totalorder %s95, %s96
      %p108 = scmp.eq.s32.totalorder %s23, 1
      %p109 = por %p107, %p108
      %p111 = scmp.ne.s32.totalorder %s96, %s110
      %p112 = scmp.eq.s32.totalorder %s23, 0
      %p113 = por %p111, %p112
      %s115 = sadd.s32 %s114, 1
      %p118 = scmp.eq.s32.totalorder %s17, 1
      %p119 = scmp.ne.s32.totalorder %s114, %s116
      %p120 = scmp.eq.s32.totalorder %s17, 0
      %p121 = por %p119, %p120
      %p122 = scmp.ne.s32.totalorder %s114, %s116
      %p123 = scmp.eq.s32.totalorder %s22, 1
      %p124 = por %p122, %p123
      %p125 = scmp.ne.s32.totalorder %s116, %s117
      %p126 = scmp.eq.s32.totalorder %s22, 0
      %p127 = por %p125, %p126
      %p128 = scmp.ne.s32.totalorder %s116, %s117
      %p129 = scmp.eq.s32.totalorder %s23, 1
      %p130 = por %p128, %p129
      %p132 = scmp.ne.s32.totalorder %s117, %s131
      %p133 = scmp.eq.s32.totalorder %s23, 0
      %p134 = por %p132, %p133
      %s136 = sadd.s32 %s135, 1
      %p139 = scmp.eq.s32.totalorder %s17, 1
      %p140 = scmp.ne.s32.totalorder %s135, %s137
      %p141 = scmp.eq.s32.totalorder %s17, 0
      %p142 = por %p140, %p141
      %p143 = scmp.ne.s32.totalorder %s135, %s137
      %p144 = scmp.eq.s32.totalorder %s22, 1
      %p145 = por %p143, %p144
      %p146 = scmp.ne.s32.totalorder %s137, %s138
      %p147 = scmp.eq.s32.totalorder %s22, 0
      %p148 = por %p146, %p147
      %p149 = scmp.ne.s32.totalorder %s137, %s138
      %p150 = scmp.eq.s32.totalorder %s23, 1
      %p151 = por %p149, %p150
      %p153 = scmp.ne.s32.totalorder %s138, %s152
      %p154 = scmp.eq.s32.totalorder %s23, 0
      %p155 = por %p153, %p154
      %s157 = sadd.s32 %s156, 1
      %p160 = scmp.eq.s32.totalorder %s17, 1
      %p161 = scmp.ne.s32.totalorder %s156, %s158
      %p162 = scmp.eq.s32.totalorder %s17, 0
      %p163 = por %p161, %p162
      %p164 = scmp.ne.s32.totalorder %s156, %s158
      %p165 = scmp.eq.s32.totalorder %s22, 1
      %p166 = por %p164, %p165
      %p167 = scmp.ne.s32.totalorder %s158, %s159
      %p168 = scmp.eq.s32.totalorder %s22, 0
      %p169 = por %p167, %p168
      %p170 = scmp.ne.s32.totalorder %s158, %s159
      %p171 = scmp.eq.s32.totalorder %s23, 1
      %p172 = por %p170, %p171
      %p174 = scmp.ne.s32.totalorder %s159, %s173
      %p175 = scmp.eq.s32.totalorder %s23, 0
      %p176 = por %p174, %p175
      %s177 = ssub.s32 %s17, %s24
      %p178 = scmp.eq.s32.totalorder %s177, 0
      %s180 = sadd.s32 %s179, 1
      %s181 = scalar_select %p178, %s179, %s180
      %p184 = pneg %p178
      %p185 = scmp.eq.s32.totalorder %s17, 1
      %p186 = por %p184, %p185
      %p187 = scmp.ne.s32.totalorder %s179, %s182
      %p188 = scmp.eq.s32.totalorder %s17, 0
      %p189 = por %p187, %p188
      %p190 = scmp.ne.s32.totalorder %s179, %s182
      %p191 = scmp.eq.s32.totalorder %s22, 1
      %p192 = por %p190, %p191
      %p193 = scmp.ne.s32.totalorder %s182, %s183
      %p194 = scmp.eq.s32.totalorder %s22, 0
      %p195 = por %p193, %p194
      %p196 = scmp.ne.s32.totalorder %s182, %s183
      %p197 = scmp.eq.s32.totalorder %s23, 1
      %p198 = por %p196, %p197
      %p200 = scmp.ne.s32.totalorder %s183, %s199
      %p201 = scmp.eq.s32.totalorder %s23, 0
      %p202 = por %p200, %p201
      %p203 = scmp.le.s32.totalorder 1, %s17
      %p204 = scmp.lt.s32.totalorder %s17, 3
      %p205 = pnand %p203, %p204
      %p206 = pneg %p205
      // Predicated region
      $region9: #{tpu_custom_call.1} parent=5 // pred_check
        _
      $region10: #{tpu_custom_call.1} parent=5 // pred_check_branch
        %208 = sbr.rel (%p205) target = $region12
      $region11: #{tpu_custom_call.1} parent=5 // pred_region
        %s209 = ssub.s32 %s17, 1
        // Predicated region
        $region13: #{tpu_custom_call.1} parent=11 // pred_check
          %p210 = pneg %p64
        $region14: #{tpu_custom_call.1} parent=11 // pred_check_branch
          %212 = sbr.rel (%p210) target = $region16
        $region15: #{tpu_custom_call.1} parent=11 // pred_region
          _
        $region16: #{tpu_custom_call.1} parent=11 // pred_fallthru
          _
        // Predicated region
        $region17: #{tpu_custom_call.1} parent=11 // pred_check
          %p213 = pneg %p85
        $region18: #{tpu_custom_call.1} parent=11 // pred_check_branch
          %215 = sbr.rel (%p213) target = $region20
        $region19: #{tpu_custom_call.1} parent=11 // pred_region
          _
        $region20: #{tpu_custom_call.1} parent=11 // pred_fallthru
          _
        // Predicated region
        $region21: #{tpu_custom_call.1} parent=11 // pred_check
          %p216 = pneg %p106
        $region22: #{tpu_custom_call.1} parent=11 // pred_check_branch
          %218 = sbr.rel (%p216) target = $region24
        $region23: #{tpu_custom_call.1} parent=11 // pred_region
          _
        $region24: #{tpu_custom_call.1} parent=11 // pred_fallthru
          _
        // Predicated region
        $region25: #{tpu_custom_call.1} parent=11 // pred_check
          %p219 = pneg %p127
        $region26: #{tpu_custom_call.1} parent=11 // pred_check_branch
          %221 = sbr.rel (%p219) target = $region28
        $region27: #{tpu_custom_call.1} parent=11 // pred_region
          _
        $region28: #{tpu_custom_call.1} parent=11 // pred_fallthru
          _
        // Predicated region
        $region29: #{tpu_custom_call.1} parent=11 // pred_check
          %p222 = pneg %p148
        $region30: #{tpu_custom_call.1} parent=11 // pred_check_branch
          %224 = sbr.rel (%p222) target = $region32
        $region31: #{tpu_custom_call.1} parent=11 // pred_region
          _
        $region32: #{tpu_custom_call.1} parent=11 // pred_fallthru
          _
        // Predicated region
        $region33: #{tpu_custom_call.1} parent=11 // pred_check
          %p225 = pneg %p169
        $region34: #{tpu_custom_call.1} parent=11 // pred_check_branch
          %227 = sbr.rel (%p225) target = $region36
        $region35: #{tpu_custom_call.1} parent=11 // pred_region
          _
        $region36: #{tpu_custom_call.1} parent=11 // pred_fallthru
          _
      $region12: #{tpu_custom_call.1} parent=5 // pred_fallthru
        _
      %p228 = scmp.lt.s32.totalorder %s17, 2
      // Predicated region
      $region37: #{tpu_custom_call.1} parent=5 // pred_check
        %p229 = pneg %p228
      $region38: #{tpu_custom_call.1} parent=5 // pred_check_branch
        %231 = sbr.rel (%p229) target = $region40
      $region39: #{tpu_custom_call.1} parent=5 // pred_region
        // Predicated region
        $region41: #{tpu_custom_call.1} parent=39 // pred_check
          %p232 = pneg %p37
        $region42: #{tpu_custom_call.1} parent=39 // pred_check_branch
          %234 = sbr.rel (%p232) target = $region44
        $region43: #{tpu_custom_call.1} parent=39 // pred_region
          %s235 = sand.u32 %s27, 1
          %s236 = sand.u32 %s27, 1
          %s237 = smul.addr %s236, 32
          %s238 = scalar_lea.vmem [#allocation3], %s237
          %s239 = smul.u32 2, %s17
          %s240 = smul.addr %s239, 8
          %s241 = scalar_lea.vmem %s0, %s240
          // Predicated region
          $region45: #{tpu_custom_call.1} parent=43 // pred_check
            _
          $region46: #{tpu_custom_call.1} parent=43 // pred_check_branch
            %243 = sbr.rel (0) target = $region48
          $region47: #{tpu_custom_call.1} parent=43 // pred_region
            // Predicated region
            $region49: #{tpu_custom_call.1} parent=47 // pred_check
              _
            $region50: #{tpu_custom_call.1} parent=47 // pred_check_branch
              %245 = sbr.rel (0) target = $region52
            $region51: #{tpu_custom_call.1} parent=47 // pred_region
              loop: start=0, step=1, limit=1
              $region53: #{tpu_custom_call.1} parent=51 // loop_pre_header
                _
              $region54: #{tpu_custom_call.1} parent=51 // loop_header
                %s247 = sphi 0, %s251
                %p248 = scmp.ge.s32.totalorder %s247, 1
                %s252 = sphi %s241, %s241
                %s253 = sphi %s238, %s238
              $region55: #{tpu_custom_call.1} parent=51 // loop_header_branch
                %250 = sbr.rel (%p248) target = $region59
              $region56: #{tpu_custom_call.1} parent=51 // loop_body
                %v254 = vld [vmem:[%s252] sm:$0xff]
                %255 = vst [vmem:[%s253] sm:$0xff] %v254
                %v256 = vld [vmem:[%s252 + $0x8] sm:$0xff]
                %257 = vst [vmem:[%s253 + $0x8] sm:$0xff] %v256
                %v258 = vld [vmem:[%s252 + $0x20] sm:$0xff]
                %259 = vst [vmem:[%s253 + $0x10] sm:$0xff] %v258
                %v260 = vld [vmem:[%s252 + $0x28] sm:$0xff]
                %261 = vst [vmem:[%s253 + $0x18] sm:$0xff] %v260
              $region57: #{tpu_custom_call.1} parent=51 // loop_footer
                %s251 = sadd.s32 1, %s247
              $region58: #{tpu_custom_call.1} parent=51 // loop_footer_branch
                %246 = sbr.rel target = $region54
              $region59: #{tpu_custom_call.1} parent=51 // loop_exit
                _
            $region52: #{tpu_custom_call.1} parent=47 // pred_fallthru
              _
            // Predicated region
            $region60: #{tpu_custom_call.1} parent=47 // pred_check
              _
            $region61: #{tpu_custom_call.1} parent=47 // pred_check_branch
              %263 = sbr.rel target = $region63
            $region62: #{tpu_custom_call.1} parent=47 // pred_region
              _
            $region63: #{tpu_custom_call.1} parent=47 // pred_fallthru
              _
          $region48: #{tpu_custom_call.1} parent=43 // pred_fallthru
            _
          %264 = vnop
        $region44: #{tpu_custom_call.1} parent=39 // pred_fallthru
          _
      $region40: #{tpu_custom_call.1} parent=5 // pred_fallthru
        _
      %p265 = scmp.le.s32.totalorder 1, %s17
      %p266 = scmp.lt.s32.totalorder %s17, 3
      %p267 = pnand %p265, %p266
      %p268 = pneg %p267
      // Predicated region
      $region64: #{tpu_custom_call.1} parent=5 // pred_check
        _
      $region65: #{tpu_custom_call.1} parent=5 // pred_check_branch
        %270 = sbr.rel (%p267) target = $region67
      $region66: #{tpu_custom_call.1} parent=5 // pred_region
        %s271 = ssub.s32 %s17, 1
        %s272 = sand.u32 %s30, 1
        %s273 = sand.u32 %s30, 1
        %s274 = smul.addr %s273, 32
        %s275 = scalar_lea.vmem [#allocation3], %s274
        // Predicated region
        $region68: #{tpu_custom_call.1} parent=66 // pred_check
          %p276 = pneg %p43
        $region69: #{tpu_custom_call.1} parent=66 // pred_check_branch
          %278 = sbr.rel (%p276) target = $region71
        $region70: #{tpu_custom_call.1} parent=66 // pred_region
          _
        $region71: #{tpu_custom_call.1} parent=66 // pred_fallthru
          _
        %s279 = sand.u32 %s30, 1
        %s280 = sand.u32 %s30, 1
        %s281 = smul.addr %s280, 32
        %s282 = scalar_lea.vmem [#allocation3], %s281
        %p283 = pneg %p43
        %p284 = pneg %p40
        %p285 = pneg %p64
        %p286 = pneg %p61
        %p287 = pneg %p85
        %p288 = pneg %p82
        %p289 = pneg %p106
        %p290 = pneg %p103
        %p291 = pneg %p127
        %p292 = pneg %p124
        %p293 = pneg %p148
        %p294 = pneg %p145
        %p295 = pneg %p169
        %p296 = pneg %p166
        %p297 = pneg %p195
        %p298 = pneg %p192
        %s299 = sand.u32 %s182, 1
        %s300 = scalar_lea.sflag [#allocation5], %s299
        %s301 = sand.u32 %s182, 1
        %s302 = smul.addr %s301, 2
        %s303 = scalar_lea.vmem [#allocation4], %s302
        %s304 = smul.u32 2, %s22
        %s305 = smul.u32 2, %s22
        %v306 = vld [vmem:[%s275] sm:$0xff]
        %v307 = vld [vmem:[%s275 + $0x8] sm:$0xff]
        %v308 = vld [vmem:[%s275 + $0x10] sm:$0xff]
        %v309 = vld [vmem:[%s275 + $0x18] sm:$0xff]
        %v310 = vld [vmem:[%s1] sm:$0xff]
        %v311 = vld [vmem:[%s1 + $0x8] sm:$0xff]
        %v312 = vld [vmem:[%s1 + $0x10] sm:$0xff]
        %v313 = vld [vmem:[%s1 + $0x18] sm:$0xff]
        %v314 = vld [vmem:[%s2] sm:$0xff]
        %v315 = vld [vmem:[%s2 + $0x8] sm:$0xff]
        %v316 = vld [vmem:[%s2 + $0x10] sm:$0xff]
        %v317 = vld [vmem:[%s2 + $0x18] sm:$0xff]
        %319 = vset.pattern.permute.xlu0 0
        %320 = vperm.xlu0 %319, %v314
        %v321 = vpop.permute.xlu0 %320
        %324 = vset.pattern.permute.xlu0 0
        %325 = vperm.xlu0 %324, %v315
        %v326 = vpop.permute.xlu0 %325
        %329 = vset.pattern.permute.xlu0 0
        %330 = vperm.xlu0 %329, %v316
        %v331 = vpop.permute.xlu0 %330
        %334 = vset.pattern.permute.xlu0 0
        %335 = vperm.xlu0 %334, %v317
        %v336 = vpop.permute.xlu0 %335
        %vm338 = vcmask 130048
        %v340 = vsel %vm338, %v310, 0
        %v343 = vsel %vm338, %v311, 0
        %v346 = vsel %vm338, %v312, 0
        %v349 = vsel %vm338, %v313, 0
        %351 = vmatprep.subr.mxu0 0.0
        %352 = vmatpush1.msra.mxu0 0.0
        %353 = vmatprep.subr.mxu0 0.0
        %354 = vmatpush1.msra.mxu0 0.0
        %355 = vmatprep.subr.mxu0 0.0
        %356 = vmatpush1.msra.mxu0 0.0
        %357 = vmatprep.subr.mxu0 0.0
        %358 = vmatpush1.msra.mxu0 0.0
        %359 = vmatprep.subr.mxu0 0.0
        %360 = vmatpush1.msra.mxu0 0.0
        %361 = vmatprep.subr.mxu0 0.0
        %362 = vmatpush1.msra.mxu0 0.0
        %363 = vmatprep.subr.mxu0 0.0
        %364 = vmatpush1.msra.mxu0 0.0
        %365 = vmatprep.subr.mxu0 0.0
        %366 = vmatpush1.msra.mxu0 0.0
        %367 = vmatprep.subr.mxu0 0.0
        %368 = vmatpush1.msra.mxu0 0.0
        %369 = vmatprep.subr.mxu0 0.0
        %370 = vmatpush1.msra.mxu0 0.0
        %371 = vmatprep.subr.mxu0 0.0
        %372 = vmatpush1.msra.mxu0 0.0
        %373 = vmatprep.subr.mxu0 0.0
        %374 = vmatpush1.msra.mxu0 0.0
        %375 = vmatprep.subr.mxu0 0.0
        %376 = vmatpush1.msra.mxu0 0.0
        %377 = vmatprep.subr.mxu0 0.0
        %378 = vmatpush1.msra.mxu0 0.0
        %379 = vmatprep.subr.mxu0 %v309
        %380 = vmatpush1.msra.mxu0 %v308
        %381 = vmatprep.subr.mxu0 %v307
        %382 = vmatpush1.msra.mxu0 %v306
        %383 = vmatprep.subr.mxu0 0.0
        %384 = vmatpush2.msra.mxu0 0.0
        %385 = vmatprep.subr.mxu0 0.0
        %386 = vmatpush2.msra.mxu0 0.0
        %387 = vmatprep.subr.mxu0 0.0
        %388 = vmatpush2.msra.mxu0 0.0
        %389 = vmatprep.subr.mxu0 0.0
        %390 = vmatpush2.msra.mxu0 0.0
        %391 = vmatprep.subr.mxu0 0.0
        %392 = vmatpush2.msra.mxu0 0.0
        %393 = vmatprep.subr.mxu0 0.0
        %394 = vmatpush2.msra.mxu0 0.0
        %395 = vmatprep.subr.mxu0 0.0
        %396 = vmatpush2.msra.mxu0 0.0
        %397 = vmatprep.subr.mxu0 0.0
        %398 = vmatpush2.msra.mxu0 0.0
        %399 = vmatprep.subr.mxu0 0.0
        %400 = vmatpush2.msra.mxu0 0.0
        %401 = vmatprep.subr.mxu0 0.0
        %402 = vmatpush2.msra.mxu0 0.0
        %403 = vmatprep.subr.mxu0 0.0
        %404 = vmatpush2.msra.mxu0 0.0
        %405 = vmatprep.subr.mxu0 0.0
        %406 = vmatpush2.msra.mxu0 0.0
        %407 = vmatprep.subr.mxu0 0.0
        %408 = vmatpush2.msra.mxu0 0.0
        %409 = vmatprep.subr.mxu0 0.0
        %410 = vmatpush2.msra.mxu0 0.0
        %411 = vmatprep.subr.mxu0 0.0
        %412 = vmatpush2.msra.mxu0 0.0
        %413 = vmatprep.subr.mxu0 0.0
        %414 = vmatpush2.msra.mxu0 0.0
        %415 = vmatprep.mubr.f32.mxu0 0.0
        %416 = vmatmul.mubr.f32.gmra.mxu0 %v340
        %v417 = vpop.f32.mrf.mxu0
        %v418 = vadd.f32 %v321, %v417
        %v419 = vpop.f32.mrf.mxu0
        %v420 = vadd.f32 %v321, %v419
        %421 = vmatprep.mubr.f32.mxu0 0.0
        %422 = vmatmul.mubr.f32.gmra.mxu0 %v343
        %v423 = vpop.f32.mrf.mxu0
        %v424 = vadd.f32 %v326, %v423
        %v425 = vpop.f32.mrf.mxu0
        %v426 = vadd.f32 %v326, %v425
        %427 = vmatprep.mubr.f32.mxu0 0.0
        %428 = vmatmul.mubr.f32.gmra.mxu0 %v346
        %v429 = vpop.f32.mrf.mxu0
        %v430 = vadd.f32 %v331, %v429
        %v431 = vpop.f32.mrf.mxu0
        %v432 = vadd.f32 %v331, %v431
        %433 = vmatprep.mubr.f32.mxu0 0.0
        %434 = vmatmul.mubr.f32.gmra.mxu0 %v349
        %v435 = vpop.f32.mrf.mxu0
        %v436 = vadd.f32 %v336, %v435
        %v437 = vpop.f32.mrf.mxu0
        %v438 = vadd.f32 %v336, %v437
        %439 = vdwg.mxu0
        %v440 = vtanh.pop %v418
        %v441 = vtanh.pop %v420
        %v442 = vtanh.pop %v424
        %v443 = vtanh.pop %v426
        %v444 = vtanh.pop %v430
        %v445 = vtanh.pop %v432
        %v446 = vtanh.pop %v436
        %v447 = vtanh.pop %v438
        %v448 = vld [vmem:[%s3] sm:$0xff]
        %v449 = vld [vmem:[%s3 + $0x8] sm:$0xff]
        %v450 = vld [vmem:[%s3 + $0x10] sm:$0xff]
        %v451 = vld [vmem:[%s3 + $0x18] sm:$0xff]
        %v452 = vld [vmem:[%s4] sm:$0xff]
        %v453 = vld [vmem:[%s4 + $0x8] sm:$0xff]
        %v454 = vld [vmem:[%s4 + $0x10] sm:$0xff]
        %v455 = vld [vmem:[%s4 + $0x18] sm:$0xff]
        %457 = vset.pattern.permute.xlu0 0
        %458 = vperm.xlu0 %457, %v452
        %v459 = vpop.permute.xlu0 %458
        %462 = vset.pattern.permute.xlu0 0
        %463 = vperm.xlu0 %462, %v453
        %v464 = vpop.permute.xlu0 %463
        %467 = vset.pattern.permute.xlu0 0
        %468 = vperm.xlu0 %467, %v454
        %v469 = vpop.permute.xlu0 %468
        %472 = vset.pattern.permute.xlu0 0
        %473 = vperm.xlu0 %472, %v455
        %v474 = vpop.permute.xlu0 %473
        %vm476 = vcmask 261120
        %v478 = vsel %vm476, %v448, 0
        %v481 = vsel %vm476, %v449, 0
        %v484 = vsel %vm476, %v450, 0
        %v487 = vsel %vm476, %v451, 0
        %489 = vmatprep.subr.mxu0 0.0
        %490 = vmatpush1.msra.mxu0 0.0
        %491 = vmatprep.subr.mxu0 0.0
        %492 = vmatpush1.msra.mxu0 0.0
        %493 = vmatprep.subr.mxu0 0.0
        %494 = vmatpush1.msra.mxu0 0.0
        %495 = vmatprep.subr.mxu0 0.0
        %496 = vmatpush1.msra.mxu0 0.0
        %497 = vmatprep.subr.mxu0 0.0
        %498 = vmatpush1.msra.mxu0 0.0
        %499 = vmatprep.subr.mxu0 0.0
        %500 = vmatpush1.msra.mxu0 0.0
        %501 = vmatprep.subr.mxu0 0.0
        %502 = vmatpush1.msra.mxu0 0.0
        %503 = vmatprep.subr.mxu0 0.0
        %504 = vmatpush1.msra.mxu0 0.0
        %505 = vmatprep.subr.mxu0 0.0
        %506 = vmatpush1.msra.mxu0 0.0
        %507 = vmatprep.subr.mxu0 0.0
        %508 = vmatpush1.msra.mxu0 0.0
        %509 = vmatprep.subr.mxu0 0.0
        %510 = vmatpush1.msra.mxu0 0.0
        %511 = vmatprep.subr.mxu0 0.0
        %512 = vmatpush1.msra.mxu0 0.0
        %513 = vmatprep.subr.mxu0 %v447
        %514 = vmatpush1.msra.mxu0 %v446
        %515 = vmatprep.subr.mxu0 %v445
        %516 = vmatpush1.msra.mxu0 %v444
        %517 = vmatprep.subr.mxu0 %v443
        %518 = vmatpush1.msra.mxu0 %v442
        %519 = vmatprep.subr.mxu0 %v441
        %520 = vmatpush1.msra.mxu0 %v440
        %521 = vmatprep.subr.mxu0 0.0
        %522 = vmatpush2.msra.mxu0 0.0
        %523 = vmatprep.subr.mxu0 0.0
        %524 = vmatpush2.msra.mxu0 0.0
        %525 = vmatprep.subr.mxu0 0.0
        %526 = vmatpush2.msra.mxu0 0.0
        %527 = vmatprep.subr.mxu0 0.0
        %528 = vmatpush2.msra.mxu0 0.0
        %529 = vmatprep.subr.mxu0 0.0
        %530 = vmatpush2.msra.mxu0 0.0
        %531 = vmatprep.subr.mxu0 0.0
        %532 = vmatpush2.msra.mxu0 0.0
        %533 = vmatprep.subr.mxu0 0.0
        %534 = vmatpush2.msra.mxu0 0.0
        %535 = vmatprep.subr.mxu0 0.0
        %536 = vmatpush2.msra.mxu0 0.0
        %537 = vmatprep.subr.mxu0 0.0
        %538 = vmatpush2.msra.mxu0 0.0
        %539 = vmatprep.subr.mxu0 0.0
        %540 = vmatpush2.msra.mxu0 0.0
        %541 = vmatprep.subr.mxu0 0.0
        %542 = vmatpush2.msra.mxu0 0.0
        %543 = vmatprep.subr.mxu0 0.0
        %544 = vmatpush2.msra.mxu0 0.0
        %545 = vmatprep.subr.mxu0 0.0
        %546 = vmatpush2.msra.mxu0 0.0
        %547 = vmatprep.subr.mxu0 0.0
        %548 = vmatpush2.msra.mxu0 0.0
        %549 = vmatprep.subr.mxu0 0.0
        %550 = vmatpush2.msra.mxu0 0.0
        %551 = vmatprep.subr.mxu0 0.0
        %552 = vmatpush2.msra.mxu0 0.0
        %553 = vmatprep.mubr.f32.mxu0 0.0
        %554 = vmatmul.mubr.f32.gmra.mxu0 %v478
        %v555 = vpop.f32.mrf.mxu0
        %v556 = vadd.f32 %v459, %v555
        %v557 = vpop.f32.mrf.mxu0
        %v558 = vadd.f32 %v459, %v557
        %559 = vmatprep.mubr.f32.mxu0 0.0
        %560 = vmatmul.mubr.f32.gmra.mxu0 %v481
        %v561 = vpop.f32.mrf.mxu0
        %v562 = vadd.f32 %v464, %v561
        %v563 = vpop.f32.mrf.mxu0
        %v564 = vadd.f32 %v464, %v563
        %565 = vmatprep.mubr.f32.mxu0 0.0
        %566 = vmatmul.mubr.f32.gmra.mxu0 %v484
        %v567 = vpop.f32.mrf.mxu0
        %v568 = vadd.f32 %v469, %v567
        %v569 = vpop.f32.mrf.mxu0
        %v570 = vadd.f32 %v469, %v569
        %571 = vmatprep.mubr.f32.mxu0 0.0
        %572 = vmatmul.mubr.f32.gmra.mxu0 %v487
        %v573 = vpop.f32.mrf.mxu0
        %v574 = vadd.f32 %v474, %v573
        %v575 = vpop.f32.mrf.mxu0
        %v576 = vadd.f32 %v474, %v575
        %577 = vdwg.mxu0
        %v578 = vtanh.pop %v556
        %v579 = vtanh.pop %v558
        %v580 = vtanh.pop %v562
        %v581 = vtanh.pop %v564
        %v582 = vtanh.pop %v568
        %v583 = vtanh.pop %v570
        %v584 = vtanh.pop %v574
        %v585 = vtanh.pop %v576
        %v586 = vld [vmem:[%s5] sm:$0x1]
        %s587 = sld [smem:[#allocation2]]
        %v588 = vstv %s587
        %v590 = vsel %vm476, %v586, 0
        %592 = vmatprep.subr.mxu0 0.0
        %593 = vmatpush1.msra.mxu0 0.0
        %594 = vmatprep.subr.mxu0 0.0
        %595 = vmatpush1.msra.mxu0 0.0
        %596 = vmatprep.subr.mxu0 0.0
        %597 = vmatpush1.msra.mxu0 0.0
        %598 = vmatprep.subr.mxu0 0.0
        %599 = vmatpush1.msra.mxu0 0.0
        %600 = vmatprep.subr.mxu0 0.0
        %601 = vmatpush1.msra.mxu0 0.0
        %602 = vmatprep.subr.mxu0 0.0
        %603 = vmatpush1.msra.mxu0 0.0
        %604 = vmatprep.subr.mxu0 0.0
        %605 = vmatpush1.msra.mxu0 0.0
        %606 = vmatprep.subr.mxu0 0.0
        %607 = vmatpush1.msra.mxu0 0.0
        %608 = vmatprep.subr.mxu0 0.0
        %609 = vmatpush1.msra.mxu0 0.0
        %610 = vmatprep.subr.mxu0 0.0
        %611 = vmatpush1.msra.mxu0 0.0
        %612 = vmatprep.subr.mxu0 0.0
        %613 = vmatpush1.msra.mxu0 0.0
        %614 = vmatprep.subr.mxu0 0.0
        %615 = vmatpush1.msra.mxu0 0.0
        %616 = vmatprep.subr.mxu0 %v585
        %617 = vmatpush1.msra.mxu0 %v584
        %618 = vmatprep.subr.mxu0 %v583
        %619 = vmatpush1.msra.mxu0 %v582
        %620 = vmatprep.subr.mxu0 %v581
        %621 = vmatpush1.msra.mxu0 %v580
        %622 = vmatprep.subr.mxu0 %v579
        %623 = vmatpush1.msra.mxu0 %v578
        %624 = vmatprep.subr.mxu0 0.0
        %625 = vmatpush2.msra.mxu0 0.0
        %626 = vmatprep.subr.mxu0 0.0
        %627 = vmatpush2.msra.mxu0 0.0
        %628 = vmatprep.subr.mxu0 0.0
        %629 = vmatpush2.msra.mxu0 0.0
        %630 = vmatprep.subr.mxu0 0.0
        %631 = vmatpush2.msra.mxu0 0.0
        %632 = vmatprep.subr.mxu0 0.0
        %633 = vmatpush2.msra.mxu0 0.0
        %634 = vmatprep.subr.mxu0 0.0
        %635 = vmatpush2.msra.mxu0 0.0
        %636 = vmatprep.subr.mxu0 0.0
        %637 = vmatpush2.msra.mxu0 0.0
        %638 = vmatprep.subr.mxu0 0.0
        %639 = vmatpush2.msra.mxu0 0.0
        %640 = vmatprep.subr.mxu0 0.0
        %641 = vmatpush2.msra.mxu0 0.0
        %642 = vmatprep.subr.mxu0 0.0
        %643 = vmatpush2.msra.mxu0 0.0
        %644 = vmatprep.subr.mxu0 0.0
        %645 = vmatpush2.msra.mxu0 0.0
        %646 = vmatprep.subr.mxu0 0.0
        %647 = vmatpush2.msra.mxu0 0.0
        %648 = vmatprep.subr.mxu0 0.0
        %649 = vmatpush2.msra.mxu0 0.0
        %650 = vmatprep.subr.mxu0 0.0
        %651 = vmatpush2.msra.mxu0 0.0
        %652 = vmatprep.subr.mxu0 0.0
        %653 = vmatpush2.msra.mxu0 0.0
        %654 = vmatprep.subr.mxu0 0.0
        %655 = vmatpush2.msra.mxu0 0.0
        %656 = vmatprep.mubr.f32.mxu0 0.0
        %657 = vmatmul.mubr.f32.gmra.mxu0 %v590
        %v658 = vpop.f32.mrf.mxu0
        %v659 = vadd.f32 %v588, %v658
        %v660 = vpop.f32.mrf.mxu0
        %v661 = vadd.f32 %v588, %v660
        %662 = vdwg.mxu0
        %v665 = vcombine.low %v659, %v661
        %v667 = vunpack.c.l.s4 1966171168
        %v668 = vunpack.c.0.s8 %v667
        %v669 = vlaneseq
        %v670 = vshrl.u32 %v669, 7
        %v671 = vsub.s32 %v668, %v670
        %v672 = vrot.slane %v665, %v671
        %v674 = vunpack.c.l.s4 1966171168
        %v675 = vunpack.c.0.s8 %v674
        %v676 = vlaneseq
        %v677 = vshrl.u32 %v676, 7
        %v678 = vsub.s32 %v675, %v677
        %v679 = vrot.slane %v672, %v678
        %v681 = vlaneseq
        %vm682 = vcmp.ge.s32.totalorder %v681, 0
        %vm683 = vcmp.lt.s32.totalorder %v681, 256
        %vm684 = vmand %vm682, %vm683
        %685 = vst.msk [vmem:[%s303] sm:$0x3] %vm684, %v679
        %s686 = sand.u32 %s182, 1
        %s687 = scalar_lea.sflag [#allocation5], %s686
        %s688 = sand.u32 %s182, 1
        %s689 = smul.addr %s688, 2
        %s690 = scalar_lea.vmem [#allocation4], %s689
        // Predicated region
        $region72: #{tpu_custom_call.1} parent=66 // pred_check
          %p691 = pneg %p192
        $region73: #{tpu_custom_call.1} parent=66 // pred_check_branch
          %693 = sbr.rel (%p691) target = $region75
        $region74: #{tpu_custom_call.1} parent=66 // pred_region
          %s694 = smul.u32 2, %s22
          %s696 = ssub.s32 32, 32
          %697 = vsyncadd %s687, %s696
          %s698 = smul.addr %s694, 16
          %s699 = scalar_lea.hbm %s7, %s698
          %s701 = sshll.u32 %s690, 4
          %s702 = int_to_ptr.vmem [resolvable:$true] %s701
          %704 = dma.vmem_to_hbm [thread:$0]  %s702, 32, %s699, %s687
        $region75: #{tpu_custom_call.1} parent=66 // pred_fallthru
          _
      $region67: #{tpu_custom_call.1} parent=5 // pred_fallthru
        _
      %p705 = scmp.le.s32.totalorder 2, %s17
      // Predicated region
      $region76: #{tpu_custom_call.1} parent=5 // pred_check
        %p706 = pneg %p705
      $region77: #{tpu_custom_call.1} parent=5 // pred_check_branch
        %708 = sbr.rel (%p706) target = $region79
      $region78: #{tpu_custom_call.1} parent=5 // pred_region
        %s709 = ssub.s32 %s17, 2
        // Predicated region
        $region80: #{tpu_custom_call.1} parent=78 // pred_check
          %p710 = pneg %p198
        $region81: #{tpu_custom_call.1} parent=78 // pred_check_branch
          %712 = sbr.rel (%p710) target = $region83
        $region82: #{tpu_custom_call.1} parent=78 // pred_region
          %s713 = sand.u32 %s183, 1
          %s714 = scalar_lea.sflag [#allocation5], %s713
          %s715 = sand.u32 %s183, 1
          %s716 = smul.addr %s715, 2
          %s717 = scalar_lea.vmem [#allocation4], %s716
          %718 = dma.done %s714, 32
        $region83: #{tpu_custom_call.1} parent=78 // pred_fallthru
          _
      $region79: #{tpu_custom_call.1} parent=5 // pred_fallthru
        _
    $region6: #{tpu_custom_call.1} parent=1 // loop_footer
      %s21 = sadd.s32 1, %s17
    $region7: #{tpu_custom_call.1} parent=1 // loop_footer_branch
      %16 = sbr.rel target = $region3
    $region8: #{tpu_custom_call.1} parent=1 // loop_exit
      _
    %719 = vsyncpa [#allocation5], 1
    %s720 = scalar_lea.sflag [#allocation5], 1
    %721 = vsyncpa %s720, 1

</llo_original>
